<compile_context>
chip_gen: v7x
topology: tpu7x:2x2x1
jax: 0.10.0
libtpu: 0.0.40
codegen_flags: <defaults>
</compile_context>

<pallas_src>
import jax
import jax.numpy as jnp
from jax.experimental import pallas as pl
from jax.experimental.pallas import tpu as pltpu

_MiB = 1024 * 1024


def _round_up(x, m):
    return ((x + m - 1) // m) * m


# ----------------------------------------------------------------------------
# Kernel
# ----------------------------------------------------------------------------
def _make_bbox_head_kernel(T, HW, c_blk, num_c_blocks):
    """Kernel over grid (N_blocks, C_blocks); x block is (n_blk, c_blk, T*HW)."""

    def kernel(x_ref, w_ref, b_ref, out_ref, pooled_ref):
        x = x_ref[...].astype(jnp.float32)               # (n_blk, c_blk, T*HW)
        # Temporal sum as an unrolled add of T static lane-slices of width HW
        # (the 1/T scale is folded into the fc weight), then spatial max over
        # the HW lanes.
        s = x[:, :, 0:HW]
        for t in range(1, T):
            s = s + x[:, :, t * HW:(t + 1) * HW]
        pooled = jnp.max(s, axis=2)                      # (n_blk, c_blk)

        if num_c_blocks == 1:
            # Single C block: one full-K matmul, no scratch round-trip needed.
            out_ref[...] = (
                jnp.dot(pooled, w_ref[...], preferred_element_type=jnp.float32)
                + b_ref[...])
        else:
            c_start = pl.multiple_of(pl.program_id(1) * c_blk, c_blk)
            pooled_ref[:, pl.ds(c_start, c_blk)] = pooled

            @pl.when(pl.program_id(1) == num_c_blocks - 1)
            def _():
                out_ref[...] = (
                    jnp.dot(pooled_ref[...], w_ref[...],
                            preferred_element_type=jnp.float32)
                    + b_ref[...])

    return kernel


# ----------------------------------------------------------------------------
# Per-generation VMEM policy + padding-aware tile picker
# ----------------------------------------------------------------------------
def _vmem_policy():
    """Returns (vmem_limit_bytes, tile_budget_bytes, small_vmem)."""
    try:
        cap = int(pltpu.get_tpu_info().vmem_capacity_bytes)
    except Exception:
        cap = None
    if cap is not None and cap >= 120 * _MiB:
        # v5e / v6e: 128 MiB VMEM per TensorCore.
        return 100 * _MiB, 80 * _MiB, False
    # v7x (64 MiB per TensorCore) or unknown: stay conservative.
    if cap is None:
        cap = 64 * _MiB
    limit = min(48 * _MiB, (cap * 3) // 4)
    budget = min(26 * _MiB, (cap * 2) // 5)
    return limit, budget, True


def _sublane(itemsize):
    return {4: 8, 2: 16, 1: 32}.get(itemsize, 8)


def _padded_block_bytes(shape, itemsize):
    """VMEM bytes of a block after (sublane, 128)-lane tiling padding."""
    if len(shape) == 1:
        return _round_up(shape[0], 128) * itemsize
    lead = 1
    for d in shape[:-2]:
        lead *= d
    return (lead * _round_up(shape[-2], _sublane(itemsize))
            * _round_up(shape[-1], 128) * itemsize)


def _n_candidates(N, small_vmem):
    cands = {N}
    d = 8
    while d <= min(N, 128):
        if N % d == 0:
            cands.add(d)
        d += 8
    if small_vmem and N >= 16:
        # Keep >= 2 blocks on the "parallel" N axis so both v7x TCs get work.
        halved = {c for c in cands if 2 * c <= N}
        if halved:
            cands = halved
    return sorted(cands, reverse=True)


def _c_candidates(C):
    # 128-aligned C blocks keep the pooled-scratch store lane-aligned.
    cands = {C}
    d = 128
    while d <= C:
        if C % d == 0:
            cands.add(d)
        d += 128
    return sorted(cands, reverse=True)


def _choose_tiles(N, C, THW, x_itemsize, nc_pad, budget_bytes, small_vmem):
    n_cands = _n_candidates(N, small_vmem)
    c_cands = _c_candidates(C)

    def footprint(nb, cb):
        x_blk = _padded_block_bytes((nb, cb, THW), x_itemsize)
        w_blk = _padded_block_bytes((C, nc_pad), 4)
        b_blk = _padded_block_bytes((1, nc_pad), 4)
        o_blk = _padded_block_bytes((nb, nc_pad), 4)
        scratch = _padded_block_bytes((nb, C), 4)
        return 2 * (x_blk + w_blk + b_blk + o_blk) + scratch   # double-buffered

    best = None
    for nb in n_cands:
        for cb in c_cands:
            if footprint(nb, cb) > budget_bytes:
                continue
            # Primary: fewest grid steps; tiebreak: bigger n_blk (MXU rows),
            # then bigger c_blk.
            key = ((N // nb) * (C // cb), -nb, -cb)
            if best is None or key < best[0]:
                best = (key, nb, cb)
    if best is None:                        # nothing fits: smallest legal tiles
        return n_cands[-1], c_cands[-1]
    return best[1], best[2]


# ----------------------------------------------------------------------------
# Forward wrapper
# ----------------------------------------------------------------------------
def bbox_head_ava_forward(x_ncthw, weight, bias, *, n_blk=None, c_blk=None):
    """BBoxHeadAVA.forward (temporal avg pool -> spatial max pool -> fc_cls).

    x_ncthw : (N, C, T, H, W) float (f32 or bf16)
    weight  : (num_classes, C) float  (torch nn.Linear convention)
    bias    : (num_classes,)   float
    returns : (cls_score (N, num_classes) float32, None)
    """
    N, C, T, H, W = x_ncthw.shape
    num_classes = weight.shape[0]
    HW = H * W
    THW = T * HW

    # Free contiguous reshape of NCTHW: lane-dense (N, C, T*HW), no transpose.
    x = x_ncthw.reshape(N, C, THW)

    # Lane-dense class dim padded to a multiple of 128; 1/T folded into the
    # weight so the kernel never divides the activation block.
    nc_pad = _round_up(num_classes, 128)
    inv_t = 1.0 / float(T)
    w_pad = jnp.zeros((C, nc_pad), jnp.float32).at[:, :num_classes].set(
        weight.T.astype(jnp.float32) * inv_t)
    b_pad = jnp.zeros((1, nc_pad), jnp.float32).at[:, :num_classes].set(
        bias.astype(jnp.float32).reshape(1, num_classes))

    vmem_limit, tile_budget, small_vmem = _vmem_policy()
    if n_blk is None or c_blk is None:
        auto_n, auto_c = _choose_tiles(N, C, THW, x.dtype.itemsize, nc_pad,
                                       tile_budget, small_vmem)
        n_blk = auto_n if n_blk is None else n_blk
        c_blk = auto_c if c_blk is None else c_blk

    assert N % n_blk == 0 and C % c_blk == 0
    assert n_blk == N or n_blk % 8 == 0       # (8, .) rule for the output block
    assert c_blk == C or c_blk % 8 == 0       # (8, .) rule for the x block

    num_c_blocks = C // c_blk
    grid = (N // n_blk, num_c_blocks)

    kernel = _make_bbox_head_kernel(T, HW, c_blk, num_c_blocks)

    out_padded = pl.pallas_call(
        kernel,
        grid=grid,
        in_specs=[
            # Activation: split only on N and C; the full (T*HW) row stays in
            # lanes so vregs/DMA runs are dense.
            pl.BlockSpec((n_blk, c_blk, THW), lambda n, c: (n, c, 0)),
            # fc weight / bias: whole-resident (constant block index).
            pl.BlockSpec((C, nc_pad), lambda n, c: (0, 0)),
            pl.BlockSpec((1, nc_pad), lambda n, c: (0, 0)),
        ],
        out_specs=pl.BlockSpec((n_blk, nc_pad), lambda n, c: (n, 0)),
        out_shape=jax.ShapeDtypeStruct((N, nc_pad), jnp.float32),
        scratch_shapes=[pltpu.VMEM((n_blk, C), jnp.float32)],
        compiler_params=pltpu.CompilerParams(
            dimension_semantics=("parallel", "arbitrary"),
            vmem_limit_bytes=vmem_limit,
        ),
    )(x, w_pad, b_pad)

    # TODO(synk): loss / loss_multi_part / multi_label_accuracy / get_targets /
    # get_det_bboxes are training/eval & post-processing utilities outside
    # forward(); not implemented as kernels.
    return out_padded[:, :num_classes], None


if __name__ == "__main__":
    key = jax.random.PRNGKey(0)
    k1, k2, k3, k4, k5, k6 = jax.random.split(key, 6)

    num_classes = 81  # module default

    # Case 1: small shapes consistent with the module forward (single tile).
    N, C, T, H, W = 3, 32, 4, 8, 8
    x = jax.random.normal(k1, (N, C, T, H, W), dtype=jnp.float32)
    # init_weights(): weight ~ normal(0, 0.01), bias = 0 (deterministic key).
    weight = 0.01 * jax.random.normal(k2, (num_classes, C), dtype=jnp.float32)
    bias = jnp.zeros((num_classes,), dtype=jnp.float32)

    cls_score, bbox_pred = bbox_head_ava_forward(x, weight, bias)
    cls_score = jax.block_until_ready(cls_score)
    ref = jnp.max(jnp.mean(x, axis=2), axis=(2, 3)) @ weight.T + bias
    assert cls_score.shape == (N, num_classes)
    assert bbox_pred is None
    assert jnp.allclose(cls_score, ref, atol=1e-5, rtol=1e-5)

    # Case 2: force a (2, 2) grid so the pooled scratch accumulation across C
    # blocks and the resident output across the "arbitrary" C axis run
    # on-device.
    N2, C2, T2, H2, W2 = 16, 256, 4, 8, 8
    x2 = jax.random.normal(k3, (N2, C2, T2, H2, W2), dtype=jnp.float32)
    weight2 = 0.01 * jax.random.normal(k4, (num_classes, C2), dtype=jnp.float32)
    bias2 = 0.1 * jnp.ones((num_classes,), dtype=jnp.float32)
    cls2, _ = bbox_head_ava_forward(x2, weight2, bias2, n_blk=8, c_blk=128)
    cls2 = jax.block_until_ready(cls2)
    ref2 = jnp.max(jnp.mean(x2, axis=2), axis=(2, 3)) @ weight2.T + bias2
    assert cls2.shape == (N2, num_classes)
    assert jnp.allclose(cls2, ref2, atol=1e-4, rtol=1e-4)

    # Case 3: bf16 activations at the production AVA 7x7 spatial size (HW=49,
    # non-128 lanes) to exercise the unaligned lane-slice T-sum path and the
    # padding-aware footprint.
    N3, C3, T3, H3, W3 = 8, 128, 4, 7, 7
    x3 = jax.random.normal(k5, (N3, C3, T3, H3, W3),
                           dtype=jnp.float32).astype(jnp.bfloat16)
    weight3 = 0.01 * jax.random.normal(k6, (num_classes, C3), dtype=jnp.float32)
    bias3 = jnp.zeros((num_classes,), dtype=jnp.float32)
    cls3, _ = bbox_head_ava_forward(x3, weight3, bias3)
    cls3 = jax.block_until_ready(cls3)
    x3f = x3.astype(jnp.float32)
    ref3 = jnp.max(jnp.mean(x3f, axis=2), axis=(2, 3)) @ weight3.T + bias3
    assert cls3.shape == (N3, num_classes)
    assert jnp.allclose(cls3, ref3, atol=5e-3, rtol=5e-3)

    print("KERNEL_OK")
</pallas_src>

<mosaic_0001>
module attributes {stable_mosaic.version = 11 : i64} {
  func.func @kernel(%arg0: i32, %arg1: i32, %arg2: memref<3x32x256xf32, #tpu.memory_space<vmem>>, %arg3: memref<32x128xf32, #tpu.memory_space<vmem>>, %arg4: memref<1x128xf32, #tpu.memory_space<vmem>>, %arg5: memref<3x128xf32, #tpu.memory_space<vmem>>, %arg6: memref<3x32xf32, #tpu.memory_space<vmem>>) attributes {dimension_semantics = [#tpu.dimension_semantics<parallel>, #tpu.dimension_semantics<arbitrary>], iteration_bounds = array<i64: 1, 1>, scalar_prefetch = 0 : i64, scratch_operands = 1 : i64, tpu.core_type = #tpu.core_type<tc>, window_params = [{transform_indices = @transform_0, window_bounds = array<i64: 3, 32, 256>}, {pipeline_mode = #tpu.pipeline_mode<synchronous>, transform_indices = @transform_1, window_bounds = array<i64: 32, 128>}, {pipeline_mode = #tpu.pipeline_mode<synchronous>, transform_indices = @transform_2, window_bounds = array<i64: 1, 128>}, {transform_indices = @transform_3, window_bounds = array<i64: 3, 128>}]} {
    %c0 = arith.constant 0 : index
    %c0_0 = arith.constant 0 : index
    %c0_1 = arith.constant 0 : index
    %0 = vector.load %arg2[%c0, %c0_0, %c0_1] : memref<3x32x256xf32, #tpu.memory_space<vmem>>, vector<3x32x256xf32>
    %1 = vector.extract_strided_slice %0 {offsets = [0, 0, 0], sizes = [3, 32, 64], strides = [1, 1, 1]} : vector<3x32x256xf32> to vector<3x32x64xf32>
    %2 = vector.extract_strided_slice %0 {offsets = [0, 0, 64], sizes = [3, 32, 64], strides = [1, 1, 1]} : vector<3x32x256xf32> to vector<3x32x64xf32>
    %3 = arith.addf %1, %2 : vector<3x32x64xf32>
    %4 = vector.extract_strided_slice %0 {offsets = [0, 0, 128], sizes = [3, 32, 64], strides = [1, 1, 1]} : vector<3x32x256xf32> to vector<3x32x64xf32>
    %5 = arith.addf %3, %4 : vector<3x32x64xf32>
    %6 = vector.extract_strided_slice %0 {offsets = [0, 0, 192], sizes = [3, 32, 64], strides = [1, 1, 1]} : vector<3x32x256xf32> to vector<3x32x64xf32>
    %7 = arith.addf %5, %6 : vector<3x32x64xf32>
    %cst = arith.constant dense<0xFF800000> : vector<3x32xf32>
    %8 = vector.multi_reduction <maximumf>, %7, %cst [2] : vector<3x32x64xf32> to vector<3x32xf32>
    %c0_2 = arith.constant 0 : index
    %c0_3 = arith.constant 0 : index
    %9 = vector.load %arg3[%c0_2, %c0_3] : memref<32x128xf32, #tpu.memory_space<vmem>>, vector<32x128xf32>
    %cst_4 = arith.constant dense<0.000000e+00> : vector<3x128xf32>
    %10 = tpu.matmul %8, %9, %cst_4 {dimension_numbers = #tpu.dot_dimension_numbers<[1], [0], [0], [1], [0, 0, 1, 1], [], []>} : vector<3x32xf32>, vector<32x128xf32>, vector<3x128xf32> -> vector<3x128xf32>
    %c0_5 = arith.constant 0 : index
    %c0_6 = arith.constant 0 : index
    %11 = vector.load %arg4[%c0_5, %c0_6] : memref<1x128xf32, #tpu.memory_space<vmem>>, vector<1x128xf32>
    %12 = vector.broadcast %11 : vector<1x128xf32> to vector<3x128xf32>
    %13 = arith.addf %10, %12 : vector<3x128xf32>
    %c0_7 = arith.constant 0 : index
    %c0_8 = arith.constant 0 : index
    %14 = vector.load %arg5[%c0_7, %c0_8] : memref<3x128xf32, #tpu.memory_space<vmem>>, vector<3x128xf32>
    tpu.vector_store %arg5[%c0_7, %c0_8], %13 {strides = array<i32>} : memref<3x128xf32, #tpu.memory_space<vmem>>, vector<3x128xf32>,
    return
  }
  func.func @transform_0(%arg0: i32, %arg1: i32) -> (i32, i32, i32) {
    %c0_i32 = arith.constant 0 : i32
    %c0_i32_0 = arith.constant 0 : i32
    return %arg0, %arg1, %c0_i32 : i32, i32, i32
  }
  func.func @transform_1(%arg0: i32, %arg1: i32) -> (i32, i32) {
    %c0_i32 = arith.constant 0 : i32
    %c0_i32_0 = arith.constant 0 : i32
    %c0_i32_1 = arith.constant 0 : i32
    return %c0_i32, %c0_i32_0 : i32, i32
  }
  func.func @transform_2(%arg0: i32, %arg1: i32) -> (i32, i32) {
    %c0_i32 = arith.constant 0 : i32
    %c0_i32_0 = arith.constant 0 : i32
    %c0_i32_1 = arith.constant 0 : i32
    return %c0_i32, %c0_i32_0 : i32, i32
  }
  func.func @transform_3(%arg0: i32, %arg1: i32) -> (i32, i32) {
    %c0_i32 = arith.constant 0 : i32
    %c0_i32_0 = arith.constant 0 : i32
    return %arg0, %c0_i32 : i32, i32
  }
}

</mosaic_0001>

<llo_original>
// kernel: tpu_custom_call.1
$region0: #{tpu_custom_call.1}
  #allocation0 [shape = 'u32[]', space=smem, size = 0x4, offset = 0x4, fixed_abs, tag = 'smem constant byte address 0x4 - core index']
  #allocation1 [shape = 'u32[144,128]{1,0:T(1,128)}', space=vmem, size = 0x12000, scoped, tag = 'internal scratch']
  #allocation2 [shape = 'f32[3,32]{1,0:T(4,128)}', space=vmem, size = 0x800, scoped, tag = 'scratch operand']
  %s0 = inlined_call_operand.hbm [shape: f32[3,32,256], index: 0, kind: input, shape index: {}]
  %s1 = inlined_call_operand.hbm [shape: f32[32,128], index: 1, kind: input, shape index: {}]
  %s2 = inlined_call_operand.vmem [shape: f32[1,128], index: 2, kind: input, shape index: {}]
  %s3 = inlined_call_operand.hbm [shape: f32[3,128], index: 3, kind: output, shape index: {}]
  %s4 = sld [smem:[#allocation0]]
  $region30: #{tpu_custom_call.1} parent=0
    _
  %s6 = ssub.s32 1, %s4
  %s7 = scalar_select 0, %s6, %s4
  $region1: #{tpu_custom_call.1} parent=0
    #allocation3 [shape = 'u8[98304]{0}', space=vmem, size = 0x18000, scoped, tag = 'input window, operand 0, single buffered']
    #allocation4 [shape = 's32[1]{0}', space=sflag, size = 0x4, scoped, tag = 'scoped memory for tpu_custom_call.1']
    #allocation5 [shape = 's32[1]{0}', space=sflag, size = 0x4, scoped, tag = 'scoped memory for tpu_custom_call.1']
    #allocation6 [shape = 'u8[16384]{0}', space=vmem, size = 0x4000, scoped, tag = 'input window, operand 1, single buffered']
    #allocation7 [shape = 's32[1]{0}', space=sflag, size = 0x4, scoped, tag = 'scoped memory for tpu_custom_call.1']
    #allocation8 [shape = 'u8[2048]{0}', space=vmem, size = 0x800, scoped, tag = 'output window, operand 0, single buffered']
    %8 = vsyncpa [#allocation4], 0
    %9 = vsyncpa [#allocation7], 0
    %10 = vsyncpa [#allocation5], 0
    // Predicated region
    $region2: #{tpu_custom_call.1} parent=1 // pred_check
      _
    $region3: #{tpu_custom_call.1} parent=1 // pred_check_branch
      %12 = sbr.rel (0) target = $region5
    $region4: #{tpu_custom_call.1} parent=1 // pred_region
      %s14 = ssub.s32 3072, 3072
      %15 = vsyncadd [#allocation4], %s14
      %s16 = sshll.u32 [#allocation3], 4
      %s17 = int_to_ptr.vmem [resolvable:$true] %s16
      %22 = dma.hbm_to_vmem [thread:$0]  %s0, 3072, %s17, [#allocation4], 256, 256, 16
    $region5: #{tpu_custom_call.1} parent=1 // pred_fallthru
      _
    // Predicated region
    $region6: #{tpu_custom_call.1} parent=1 // pred_check
      _
    $region7: #{tpu_custom_call.1} parent=1 // pred_check_branch
      %24 = sbr.rel (0) target = $region9
    $region8: #{tpu_custom_call.1} parent=1 // pred_region
      %s26 = ssub.s32 512, 512
      %27 = vsyncadd [#allocation7], %s26
      %s28 = sshll.u32 [#allocation6], 4
      %s29 = int_to_ptr.vmem [resolvable:$true] %s28
      %34 = dma.hbm_to_vmem [thread:$0]  %s1, 512, %s29, [#allocation7], 128, 128, 8
    $region9: #{tpu_custom_call.1} parent=1 // pred_fallthru
      _
    // Predicated region
    $region10: #{tpu_custom_call.1} parent=1 // pred_check
      _
    $region11: #{tpu_custom_call.1} parent=1 // pred_check_branch
      %36 = sbr.rel (0) target = $region13
    $region12: #{tpu_custom_call.1} parent=1 // pred_region
      _
    $region13: #{tpu_custom_call.1} parent=1 // pred_fallthru
      _
    // Predicated region
    $region14: #{tpu_custom_call.1} parent=1 // pred_check
      _
    $region15: #{tpu_custom_call.1} parent=1 // pred_check_branch
      %38 = sbr.rel (0) target = $region17
    $region16: #{tpu_custom_call.1} parent=1 // pred_region
      %39 = dma.done [#allocation4], 3072
    $region17: #{tpu_custom_call.1} parent=1 // pred_fallthru
      _
    // Predicated region
    $region18: #{tpu_custom_call.1} parent=1 // pred_check
      _
    $region19: #{tpu_custom_call.1} parent=1 // pred_check_branch
      %41 = sbr.rel (0) target = $region21
    $region20: #{tpu_custom_call.1} parent=1 // pred_region
      %42 = dma.done [#allocation7], 512
    $region21: #{tpu_custom_call.1} parent=1 // pred_fallthru
      _
    %v43 = vld [vmem:[#allocation3] sm:$0xff]
    %v44 = vld [vmem:[#allocation3 + $0x8] sm:$0xff]
    %v45 = vld [vmem:[#allocation3 + $0x10] sm:$0xff]
    %v46 = vld [vmem:[#allocation3 + $0x18] sm:$0xff]
    %v47 = vld [vmem:[#allocation3 + $0x20] sm:$0xff]
    %v48 = vld [vmem:[#allocation3 + $0x28] sm:$0xff]
    %v49 = vld [vmem:[#allocation3 + $0x30] sm:$0xff]
    %v50 = vld [vmem:[#allocation3 + $0x38] sm:$0xff]
    %v51 = vld [vmem:[#allocation3 + $0x40] sm:$0xff]
    %v52 = vld [vmem:[#allocation3 + $0x48] sm:$0xff]
    %v53 = vld [vmem:[#allocation3 + $0x50] sm:$0xff]
    %v54 = vld [vmem:[#allocation3 + $0x58] sm:$0xff]
    %v55 = vld [vmem:[#allocation3 + $0x60] sm:$0xff]
    %v56 = vld [vmem:[#allocation3 + $0x68] sm:$0xff]
    %v57 = vld [vmem:[#allocation3 + $0x70] sm:$0xff]
    %v58 = vld [vmem:[#allocation3 + $0x78] sm:$0xff]
    %v59 = vld [vmem:[#allocation3 + $0x80] sm:$0xff]
    %v60 = vld [vmem:[#allocation3 + $0x88] sm:$0xff]
    %v61 = vld [vmem:[#allocation3 + $0x90] sm:$0xff]
    %v62 = vld [vmem:[#allocation3 + $0x98] sm:$0xff]
    %v63 = vld [vmem:[#allocation3 + $0xa0] sm:$0xff]
    %v64 = vld [vmem:[#allocation3 + $0xa8] sm:$0xff]
    %v65 = vld [vmem:[#allocation3 + $0xb0] sm:$0xff]
    %v66 = vld [vmem:[#allocation3 + $0xb8] sm:$0xff]
    %79 = vrot.lane.b32.xlu0 %v43, 64
    %v80 = vpop.permute.xlu0 %79
    %81 = vrot.lane.b32.xlu0 %v45, 64
    %v82 = vpop.permute.xlu0 %81
    %83 = vrot.lane.b32.xlu0 %v47, 64
    %v84 = vpop.permute.xlu0 %83
    %85 = vrot.lane.b32.xlu0 %v49, 64
    %v86 = vpop.permute.xlu0 %85
    %87 = vrot.lane.b32.xlu0 %v51, 64
    %v88 = vpop.permute.xlu0 %87
    %89 = vrot.lane.b32.xlu0 %v53, 64
    %v90 = vpop.permute.xlu0 %89
    %91 = vrot.lane.b32.xlu0 %v55, 64
    %v92 = vpop.permute.xlu0 %91
    %93 = vrot.lane.b32.xlu0 %v57, 64
    %v94 = vpop.permute.xlu0 %93
    %95 = vrot.lane.b32.xlu0 %v59, 64
    %v96 = vpop.permute.xlu0 %95
    %97 = vrot.lane.b32.xlu0 %v61, 64
    %v98 = vpop.permute.xlu0 %97
    %99 = vrot.lane.b32.xlu0 %v63, 64
    %v100 = vpop.permute.xlu0 %99
    %101 = vrot.lane.b32.xlu0 %v65, 64
    %v102 = vpop.permute.xlu0 %101
    %v115 = vadd.f32 %v43, %v80
    %v116 = vadd.f32 %v45, %v82
    %v117 = vadd.f32 %v47, %v84
    %v118 = vadd.f32 %v49, %v86
    %v119 = vadd.f32 %v51, %v88
    %v120 = vadd.f32 %v53, %v90
    %v121 = vadd.f32 %v55, %v92
    %v122 = vadd.f32 %v57, %v94
    %v123 = vadd.f32 %v59, %v96
    %v124 = vadd.f32 %v61, %v98
    %v125 = vadd.f32 %v63, %v100
    %v126 = vadd.f32 %v65, %v102
    %v127 = vadd.f32 %v115, %v44
    %v128 = vadd.f32 %v116, %v46
    %v129 = vadd.f32 %v117, %v48
    %v130 = vadd.f32 %v118, %v50
    %v131 = vadd.f32 %v119, %v52
    %v132 = vadd.f32 %v120, %v54
    %v133 = vadd.f32 %v121, %v56
    %v134 = vadd.f32 %v122, %v58
    %v135 = vadd.f32 %v123, %v60
    %v136 = vadd.f32 %v124, %v62
    %v137 = vadd.f32 %v125, %v64
    %v138 = vadd.f32 %v126, %v66
    %151 = vrot.lane.b32.xlu0 %v44, 64
    %v152 = vpop.permute.xlu0 %151
    %153 = vrot.lane.b32.xlu0 %v46, 64
    %v154 = vpop.permute.xlu0 %153
    %155 = vrot.lane.b32.xlu0 %v48, 64
    %v156 = vpop.permute.xlu0 %155
    %157 = vrot.lane.b32.xlu0 %v50, 64
    %v158 = vpop.permute.xlu0 %157
    %159 = vrot.lane.b32.xlu0 %v52, 64
    %v160 = vpop.permute.xlu0 %159
    %161 = vrot.lane.b32.xlu0 %v54, 64
    %v162 = vpop.permute.xlu0 %161
    %163 = vrot.lane.b32.xlu0 %v56, 64
    %v164 = vpop.permute.xlu0 %163
    %165 = vrot.lane.b32.xlu0 %v58, 64
    %v166 = vpop.permute.xlu0 %165
    %167 = vrot.lane.b32.xlu0 %v60, 64
    %v168 = vpop.permute.xlu0 %167
    %169 = vrot.lane.b32.xlu0 %v62, 64
    %v170 = vpop.permute.xlu0 %169
    %171 = vrot.lane.b32.xlu0 %v64, 64
    %v172 = vpop.permute.xlu0 %171
    %173 = vrot.lane.b32.xlu0 %v66, 64
    %v174 = vpop.permute.xlu0 %173
    %v187 = vadd.f32 %v127, %v152
    %v188 = vadd.f32 %v128, %v154
    %v189 = vadd.f32 %v129, %v156
    %v190 = vadd.f32 %v130, %v158
    %v191 = vadd.f32 %v131, %v160
    %v192 = vadd.f32 %v132, %v162
    %v193 = vadd.f32 %v133, %v164
    %v194 = vadd.f32 %v134, %v166
    %v195 = vadd.f32 %v135, %v168
    %v196 = vadd.f32 %v136, %v170
    %v197 = vadd.f32 %v137, %v172
    %v198 = vadd.f32 %v138, %v174
    %vm199 = vcmask 523264
    %v200 = vsel %vm199, %v187, -inf
    %201 = vmax.xlane.f32.xlu0 %v200
    %v202 = vpop.xlane.xlu0 %201
    %v203 = vsel %vm199, %v188, -inf
    %204 = vmax.xlane.f32.xlu0 %v203
    %v205 = vpop.xlane.xlu0 %204
    %v206 = vsel %vm199, %v189, -inf
    %207 = vmax.xlane.f32.xlu0 %v206
    %v208 = vpop.xlane.xlu0 %207
    %v209 = vsel %vm199, %v190, -inf
    %210 = vmax.xlane.f32.xlu0 %v209
    %v211 = vpop.xlane.xlu0 %210
    %v212 = vsel %vm199, %v191, -inf
    %213 = vmax.xlane.f32.xlu0 %v212
    %v214 = vpop.xlane.xlu0 %213
    %v215 = vsel %vm199, %v192, -inf
    %216 = vmax.xlane.f32.xlu0 %v215
    %v217 = vpop.xlane.xlu0 %216
    %v218 = vsel %vm199, %v193, -inf
    %219 = vmax.xlane.f32.xlu0 %v218
    %v220 = vpop.xlane.xlu0 %219
    %v221 = vsel %vm199, %v194, -inf
    %222 = vmax.xlane.f32.xlu0 %v221
    %v223 = vpop.xlane.xlu0 %222
    %v224 = vsel %vm199, %v195, -inf
    %225 = vmax.xlane.f32.xlu0 %v224
    %v226 = vpop.xlane.xlu0 %225
    %v227 = vsel %vm199, %v196, -inf
    %228 = vmax.xlane.f32.xlu0 %v227
    %v229 = vpop.xlane.xlu0 %228
    %v230 = vsel %vm199, %v197, -inf
    %231 = vmax.xlane.f32.xlu0 %v230
    %v232 = vpop.xlane.xlu0 %231
    %v233 = vsel %vm199, %v198, -inf
    %234 = vmax.xlane.f32.xlu0 %v233
    %v235 = vpop.xlane.xlu0 %234
    %v236 = vld [vmem:[#allocation6] sm:$0xff]
    %v237 = vld [vmem:[#allocation6 + $0x8] sm:$0xff]
    %v238 = vld [vmem:[#allocation6 + $0x10] sm:$0xff]
    %v239 = vld [vmem:[#allocation6 + $0x18] sm:$0xff]
    %v240 = vld [vmem:[%s2] sm:$0x1]
    %v242 = vlaneseq
    %v243 = vshrl.u32 %v242, 7
    %v244 = vsub.s32 0, %v243
    %v245 = vrot.slane %v240, %v244
    %v259 = vlaneseq
    %v260 = vand.u32 %v259, 127
    %v261 = vlaneseq
    %v262 = vshrl.u32 %v261, 7
    %v263 = vsub.s32 %v260, %v262
    %v264 = vrot.slane %v202, %v263
    %v265 = vadd.s32 %v260, 4294967288
    %v266 = vlaneseq
    %v267 = vshrl.u32 %v266, 7
    %v268 = vsub.s32 %v265, %v267
    %v269 = vrot.slane %v205, %v268
    %vm270 = vcmask 130112
    %v271 = vsel %vm270, %v269, %v264
    %v272 = vadd.s32 %v260, 4294967280
    %v273 = vlaneseq
    %v274 = vshrl.u32 %v273, 7
    %v275 = vsub.s32 %v272, %v274
    %v276 = vrot.slane %v208, %v275
    %vm277 = vcmask 195712
    %v278 = vsel %vm277, %v276, %v271
    %v279 = vadd.s32 %v260, 4294967272
    %v280 = vlaneseq
    %v281 = vshrl.u32 %v280, 7
    %v282 = vsub.s32 %v279, %v281
    %v283 = vrot.slane %v211, %v282
    %vm284 = vcmask 261312
    %v285 = vsel %vm284, %v283, %v278
    %v286 = vlaneseq
    %v287 = vshrl.u32 %v286, 7
    %v288 = vsub.s32 %v260, %v287
    %v289 = vrot.slane %v214, %v288
    %v290 = vlaneseq
    %v291 = vshrl.u32 %v290, 7
    %v292 = vsub.s32 %v265, %v291
    %v293 = vrot.slane %v217, %v292
    %v294 = vsel %vm270, %v293, %v289
    %v295 = vlaneseq
    %v296 = vshrl.u32 %v295, 7
    %v297 = vsub.s32 %v272, %v296
    %v298 = vrot.slane %v220, %v297
    %v299 = vsel %vm277, %v298, %v294
    %v300 = vlaneseq
    %v301 = vshrl.u32 %v300, 7
    %v302 = vsub.s32 %v279, %v301
    %v303 = vrot.slane %v223, %v302
    %v304 = vsel %vm284, %v303, %v299
    %v305 = vlaneseq
    %v306 = vshrl.u32 %v305, 7
    %v307 = vsub.s32 %v260, %v306
    %v308 = vrot.slane %v226, %v307
    %v309 = vlaneseq
    %v310 = vshrl.u32 %v309, 7
    %v311 = vsub.s32 %v265, %v310
    %v312 = vrot.slane %v229, %v311
    %v313 = vsel %vm270, %v312, %v308
    %v314 = vlaneseq
    %v315 = vshrl.u32 %v314, 7
    %v316 = vsub.s32 %v272, %v315
    %v317 = vrot.slane %v232, %v316
    %v318 = vsel %vm277, %v317, %v313
    %v319 = vlaneseq
    %v320 = vshrl.u32 %v319, 7
    %v321 = vsub.s32 %v279, %v320
    %v322 = vrot.slane %v235, %v321
    %v323 = vsel %vm284, %v322, %v318
    %vm324 = vcmask 1041409
    %v325 = vsel %vm324, %v304, %v285
    %vm326 = vcmask 1042434
    %v327 = vsel %vm326, %v323, %v325
    %vm328 = vcmask 261120
    %v329 = vsel %vm328, %v327, 0
    %331 = vmatprep.subr.mxu0 0.0
    %332 = vmatpush1.msra.mxu0 %v236
    %333 = vmatprep.subr.mxu0 0.0
    %334 = vmatpush1.msra.mxu0 %v237
    %335 = vmatprep.subr.mxu0 0.0
    %336 = vmatpush1.msra.mxu0 %v238
    %337 = vmatprep.subr.mxu0 0.0
    %338 = vmatpush1.msra.mxu0 %v239
    %339 = vmatprep.subr.mxu0 0.0
    %340 = vmatpush1.msra.mxu0 0.0
    %341 = vmatprep.subr.mxu0 0.0
    %342 = vmatpush1.msra.mxu0 0.0
    %343 = vmatprep.subr.mxu0 0.0
    %344 = vmatpush1.msra.mxu0 0.0
    %345 = vmatprep.subr.mxu0 0.0
    %346 = vmatpush1.msra.mxu0 0.0
    %347 = vmatprep.subr.mxu0 0.0
    %348 = vmatpush1.msra.mxu0 0.0
    %349 = vmatprep.subr.mxu0 0.0
    %350 = vmatpush1.msra.mxu0 0.0
    %351 = vmatprep.subr.mxu0 0.0
    %352 = vmatpush1.msra.mxu0 0.0
    %353 = vmatprep.subr.mxu0 0.0
    %354 = vmatpush1.msra.mxu0 0.0
    %355 = vmatprep.subr.mxu0 0.0
    %356 = vmatpush1.msra.mxu0 0.0
    %357 = vmatprep.subr.mxu0 0.0
    %358 = vmatpush1.msra.mxu0 0.0
    %359 = vmatprep.subr.mxu0 0.0
    %360 = vmatpush1.msra.mxu0 0.0
    %361 = vmatprep.subr.mxu0 0.0
    %362 = vmatpush1.msra.mxu0 0.0
    %363 = vmatprep.subr.mxu0 0.0
    %364 = vmatpush1.msra.mxu0 0.0
    %365 = vmatprep.subr.mxu0 0.0
    %366 = vmatpush1.msra.mxu0 0.0
    %367 = vmatprep.subr.mxu0 0.0
    %368 = vmatpush1.msra.mxu0 0.0
    %369 = vmatprep.subr.mxu0 0.0
    %370 = vmatpush1.msra.mxu0 0.0
    %371 = vmatprep.subr.mxu0 0.0
    %372 = vmatpush1.msra.mxu0 0.0
    %373 = vmatprep.subr.mxu0 0.0
    %374 = vmatpush1.msra.mxu0 0.0
    %375 = vmatprep.subr.mxu0 0.0
    %376 = vmatpush1.msra.mxu0 0.0
    %377 = vmatprep.subr.mxu0 0.0
    %378 = vmatpush1.msra.mxu0 0.0
    %379 = vmatprep.subr.mxu0 0.0
    %380 = vmatpush1.msra.mxu0 0.0
    %381 = vmatprep.subr.mxu0 0.0
    %382 = vmatpush1.msra.mxu0 0.0
    %383 = vmatprep.subr.mxu0 0.0
    %384 = vmatpush1.msra.mxu0 0.0
    %385 = vmatprep.subr.mxu0 0.0
    %386 = vmatpush1.msra.mxu0 0.0
    %387 = vmatprep.subr.mxu0 0.0
    %388 = vmatpush1.msra.mxu0 0.0
    %389 = vmatprep.subr.mxu0 0.0
    %390 = vmatpush1.msra.mxu0 0.0
    %391 = vmatprep.subr.mxu0 0.0
    %392 = vmatpush1.msra.mxu0 0.0
    %393 = vmatprep.subr.mxu0 0.0
    %394 = vmatpush1.msra.mxu0 0.0
    %395 = vmatprep.mubr.f32.mxu0 0.0
    %396 = vmatmul.mubr.f32.gmra.mrb[0].mxu0 %v329
    %v397 = vpop.f32.mrb[0].mxu0
    %v398 = vadd.f32 %v245, %v397
    %v399 = vpop.f32.mrb[0].mxu0
    %400 = vdwg.mxu0
    %401 = vst [vmem:[#allocation8] sm:$0x7] %v398
    // Predicated region
    $region22: #{tpu_custom_call.1} parent=1 // pred_check
      _
    $region23: #{tpu_custom_call.1} parent=1 // pred_check_branch
      %403 = sbr.rel (0) target = $region25
    $region24: #{tpu_custom_call.1} parent=1 // pred_region
      %s405 = ssub.s32 64, 64
      %406 = vsyncadd [#allocation5], %s405
      %s408 = sshll.u32 [#allocation8], 4
      %s409 = int_to_ptr.vmem [resolvable:$true] %s408
      %411 = dma.vmem_to_hbm [thread:$0]  %s409, 64, %s3, [#allocation5]
    $region25: #{tpu_custom_call.1} parent=1 // pred_fallthru
      _
    // Predicated region
    $region26: #{tpu_custom_call.1} parent=1 // pred_check
      _
    $region27: #{tpu_custom_call.1} parent=1 // pred_check_branch
      %413 = sbr.rel (0) target = $region29
    $region28: #{tpu_custom_call.1} parent=1 // pred_region
      %414 = dma.done [#allocation5], 64
    $region29: #{tpu_custom_call.1} parent=1 // pred_fallthru
      _
    %415 = vsyncpa [#allocation4], 1
    %416 = vsyncpa [#allocation7], 1
    %417 = vsyncpa [#allocation5], 1

</llo_original>
